<compile_context>
chip_gen: v6e
topology: v6e:2x2x1
jax: 0.10.0
libtpu: 0.0.40
codegen_flags: <defaults>
</compile_context>

<pallas_src>
import jax
import jax.numpy as jnp
from jax.experimental import pallas as pl
from jax.experimental.pallas import tpu as pltpu


def _round_up(v, m):
    return ((v + m - 1) // m) * m


def _cdiv(a, b):
    return (a + b - 1) // b


def _classifier_kernel(x_ref, w_ref, b_ref, o_ref, acc_ref):
    # x_ref:   (tm, tk)           VMEM  row/K tile of flattened input
    # w_ref:   (tk, num_labels)   VMEM  weight, canonical (K, N) layout
    # b_ref:   (1, num_labels)    VMEM
    # o_ref:   (tm, num_labels)   VMEM  true-width output block (masked store)
    # acc_ref: (tm, num_labels)   VMEM  f32 accumulator, resident across K
    k = pl.program_id(1)

    @pl.when(k == 0)
    def _():
        acc_ref[...] = jnp.zeros_like(acc_ref)

    # Canonical (M, K) x (K, N) matmul on the MXU with f32 accumulation.
    acc_ref[...] += jnp.dot(x_ref[...], w_ref[...],
                            preferred_element_type=jnp.float32)

    @pl.when(k == pl.num_programs(1) - 1)
    def _():
        o_ref[...] = (acc_ref[...] + b_ref[...].astype(jnp.float32)).astype(o_ref.dtype)


def classifier_forward(x, weight, bias, dropout_rate=0.0, training=False):
    """x: (..., input_dim); weight: (num_labels, input_dim) torch-style; bias: (num_labels,)."""
    if training and dropout_rate > 0.0:
        # TODO(synk): training-mode dropout (rate > 0) needs pltpu.prng_seed +
        # pltpu.prng_random_bits masking inside the kernel; refuse loudly
        # rather than silently returning un-dropped activations.
        raise NotImplementedError("training-mode dropout not implemented")
    # Eval-mode dropout (and rate == 0.0) is the identity.

    in_dim = x.shape[-1]
    num_labels = weight.shape[0]
    lead_shape = x.shape[:-1]
    rows = 1
    for d in lead_shape:
        rows *= d

    if rows == 0:  # degenerate empty input
        return jnp.zeros((*lead_shape, num_labels), dtype=x.dtype)

    x2d = x.reshape(rows, in_dim)
    w_t = jnp.transpose(weight)          # (in_dim, num_labels) -> canonical (K, N)
    b2d = bias.reshape(1, num_labels)

    x_bytes = jnp.dtype(x.dtype).itemsize
    w_bytes_e = jnp.dtype(weight.dtype).itemsize
    o_bytes = x_bytes

    # Dtype-aware sublane alignment for the row tile (8 f32 / 16 bf16 / 32 int8).
    sub = max(8, 32 // x_bytes)

    # ---- K tiling: keep the row tile large instead of collapsing it. ----
    MAX_TK = 2048
    if in_dim <= MAX_TK:
        tk = in_dim
    else:
        tk = in_dim  # fallback: full-K tile
        for cand in range(MAX_TK, 0, -128):
            if in_dim % cand == 0:
                tk = cand
                break
        # TODO(synk): huge in_dim with no 128-multiple divisor <= MAX_TK falls
        # back to a full-K tile (tm shrinks instead); ragged-K would pollute
        # the reduction so it is intentionally not used.
    k_tiles = in_dim // tk

    # ---- Row-tile sizing, VMEM aware (safe for v7x's 64 MiB-per-TC part). ----
    vmem_budget = 24 * 1024 * 1024                      # headroom under 32 MiB scoped limit
    per_row = 2 * tk * x_bytes + 2 * num_labels * o_bytes + num_labels * 4  # dbl-buf x + dbl-buf out + acc
    resident = 2 * tk * num_labels * w_bytes_e + 2 * num_labels * w_bytes_e  # dbl-buf weight + bias
    tm = int(max((vmem_budget - resident) // max(per_row, 1), sub))
    tm = min(tm, 2048)
    if rows > 1024:
        # v7x: make sure the "parallel" row axis has >= 2 steps so both TCs work.
        tm = min(tm, _round_up(_cdiv(rows, 2), sub))
    tm = max(sub, (tm // sub) * sub)
    tm = min(tm, _round_up(rows, sub))

    grid = (_cdiv(rows, tm), k_tiles)

    cost = pl.CostEstimate(
        flops=2 * rows * in_dim * num_labels,
        transcendentals=0,
        bytes_accessed=(rows * in_dim * x_bytes
                        + in_dim * num_labels * w_bytes_e
                        + num_labels * jnp.dtype(bias.dtype).itemsize
                        + rows * num_labels * o_bytes),
    )

    out2d = pl.pallas_call(
        _classifier_kernel,
        out_shape=jax.ShapeDtypeStruct((rows, num_labels), x.dtype),
        grid_spec=pltpu.PrefetchScalarGridSpec(
            num_scalar_prefetch=0,
            grid=grid,
            in_specs=[
                pl.BlockSpec((tm, tk), lambda i, k: (i, k)),           # activations (row, K) tile
                pl.BlockSpec((tk, num_labels), lambda i, k: (k, 0)),   # weight, (K, N) layout
                pl.BlockSpec((1, num_labels), lambda i, k: (0, 0)),    # bias resident
            ],
            out_specs=pl.BlockSpec((tm, num_labels), lambda i, k: (i, 0)),
            scratch_shapes=[pltpu.VMEM((tm, num_labels), jnp.float32)],
        ),
        compiler_params=pltpu.CompilerParams(
            dimension_semantics=("parallel", "arbitrary"),  # rows shard across TCs; K is a reduction
            vmem_limit_bytes=32 * 1024 * 1024,
        ),
        cost_estimate=cost,
    )(x2d, w_t, b2d)

    return out2d.reshape(*lead_shape, num_labels)


if __name__ == "__main__":
    # Small shapes consistent with the module: batch=2, seq=8, hidden(input_dim)=32,
    # num_re_labels=4.
    batch, seq, input_dim, num_re_labels = 2, 8, 32, 4

    key = jax.random.PRNGKey(0)
    kx, kw, kb = jax.random.split(key, 3)

    x = jax.random.normal(kx, (batch, seq, input_dim), dtype=jnp.float32)
    # Deterministic parameter init (mimicking nn.Linear's uniform init bounds).
    bound = 1.0 / (input_dim ** 0.5)
    weight = jax.random.uniform(kw, (num_re_labels, input_dim),
                                minval=-bound, maxval=bound, dtype=jnp.float32)
    bias = jax.random.uniform(kb, (num_re_labels,),
                              minval=-bound, maxval=bound, dtype=jnp.float32)

    out = classifier_forward(x, weight, bias, dropout_rate=0.0)
    out = jax.block_until_ready(out)

    # Reference check in plain JAX (x @ W^T + b, dropout=identity).
    ref = x @ weight.T + bias
    assert out.shape == (batch, seq, num_re_labels)
    assert jnp.allclose(out, ref, atol=1e-5, rtol=1e-5)

    print("KERNEL_OK")
</pallas_src>

<mosaic_0001>
module attributes {stable_mosaic.version = 11 : i64} {
  func.func @_classifier_kernel(%arg0: i32, %arg1: i32, %arg2: memref<16x32xf32, #tpu.memory_space<vmem>>, %arg3: memref<32x4xf32, #tpu.memory_space<vmem>>, %arg4: memref<1x4xf32, #tpu.memory_space<vmem>>, %arg5: memref<16x4xf32, #tpu.memory_space<vmem>>, %arg6: memref<16x4xf32, #tpu.memory_space<vmem>>) attributes {dimension_semantics = [#tpu.dimension_semantics<parallel>, #tpu.dimension_semantics<arbitrary>], iteration_bounds = array<i64: 1, 1>, scalar_prefetch = 0 : i64, scratch_operands = 1 : i64, tpu.core_type = #tpu.core_type<tc>, window_params = [{transform_indices = @transform_0, window_bounds = array<i64: 16, 32>}, {transform_indices = @transform_1, window_bounds = array<i64: 32, 4>}, {pipeline_mode = #tpu.pipeline_mode<synchronous>, transform_indices = @transform_2, window_bounds = array<i64: 1, 4>}, {transform_indices = @transform_3, window_bounds = array<i64: 16, 4>}]} {
    %c0_i32 = arith.constant 0 : i32
    %0 = arith.cmpi eq, %arg1, %c0_i32 : i32
    %1 = arith.extui %0 : i1 to i32
    %c0_i32_0 = arith.constant 0 : i32
    %2 = arith.cmpi ne, %1, %c0_i32_0 : i32
    scf.if %2 {
      %cst_10 = arith.constant 0.000000e+00 : f32
      %12 = vector.broadcast %cst_10 : f32 to vector<16x4xf32>
      %c0_11 = arith.constant 0 : index
      %c0_12 = arith.constant 0 : index
      %13 = vector.load %arg6[%c0_11, %c0_12] : memref<16x4xf32, #tpu.memory_space<vmem>>, vector<16x4xf32>
      tpu.vector_store %arg6[%c0_11, %c0_12], %12 {strides = array<i32>} : memref<16x4xf32, #tpu.memory_space<vmem>>, vector<16x4xf32>,
    } else {
    }
    %c0 = arith.constant 0 : index
    %c0_1 = arith.constant 0 : index
    %3 = vector.load %arg6[%c0, %c0_1] : memref<16x4xf32, #tpu.memory_space<vmem>>, vector<16x4xf32>
    %c0_2 = arith.constant 0 : index
    %c0_3 = arith.constant 0 : index
    %4 = vector.load %arg2[%c0_2, %c0_3] : memref<16x32xf32, #tpu.memory_space<vmem>>, vector<16x32xf32>
    %c0_4 = arith.constant 0 : index
    %c0_5 = arith.constant 0 : index
    %5 = vector.load %arg3[%c0_4, %c0_5] : memref<32x4xf32, #tpu.memory_space<vmem>>, vector<32x4xf32>
    %cst = arith.constant dense<0.000000e+00> : vector<16x4xf32>
    %6 = tpu.matmul %4, %5, %cst {dimension_numbers = #tpu.dot_dimension_numbers<[1], [0], [0], [1], [0, 0, 1, 1], [], []>} : vector<16x32xf32>, vector<32x4xf32>, vector<16x4xf32> -> vector<16x4xf32>
    %7 = arith.addf %3, %6 : vector<16x4xf32>
    %c0_6 = arith.constant 0 : index
    %c0_7 = arith.constant 0 : index
    %8 = vector.load %arg6[%c0_6, %c0_7] : memref<16x4xf32, #tpu.memory_space<vmem>>, vector<16x4xf32>
    tpu.vector_store %arg6[%c0_6, %c0_7], %7 {strides = array<i32>} : memref<16x4xf32, #tpu.memory_space<vmem>>, vector<16x4xf32>,
    %c0_i32_8 = arith.constant 0 : i32
    %9 = arith.cmpi eq, %arg1, %c0_i32_8 : i32
    %10 = arith.extui %9 : i1 to i32
    %c0_i32_9 = arith.constant 0 : i32
    %11 = arith.cmpi ne, %10, %c0_i32_9 : i32
    scf.if %11 {
      %c0_10 = arith.constant 0 : index
      %c0_11 = arith.constant 0 : index
      %12 = vector.load %arg6[%c0_10, %c0_11] : memref<16x4xf32, #tpu.memory_space<vmem>>, vector<16x4xf32>
      %c0_12 = arith.constant 0 : index
      %c0_13 = arith.constant 0 : index
      %13 = vector.load %arg4[%c0_12, %c0_13] : memref<1x4xf32, #tpu.memory_space<vmem>>, vector<1x4xf32>
      %14 = vector.broadcast %13 : vector<1x4xf32> to vector<16x4xf32>
      %15 = arith.addf %12, %14 : vector<16x4xf32>
      %c0_14 = arith.constant 0 : index
      %c0_15 = arith.constant 0 : index
      %16 = vector.load %arg5[%c0_14, %c0_15] : memref<16x4xf32, #tpu.memory_space<vmem>>, vector<16x4xf32>
      tpu.vector_store %arg5[%c0_14, %c0_15], %15 {strides = array<i32>} : memref<16x4xf32, #tpu.memory_space<vmem>>, vector<16x4xf32>,
    } else {
    }
    return
  }
  func.func @transform_0(%arg0: i32, %arg1: i32) -> (i32, i32) {
    %c0_i32 = arith.constant 0 : i32
    return %arg0, %arg1 : i32, i32
  }
  func.func @transform_1(%arg0: i32, %arg1: i32) -> (i32, i32) {
    %c0_i32 = arith.constant 0 : i32
    %c0_i32_0 = arith.constant 0 : i32
    return %arg1, %c0_i32 : i32, i32
  }
  func.func @transform_2(%arg0: i32, %arg1: i32) -> (i32, i32) {
    %c0_i32 = arith.constant 0 : i32
    %c0_i32_0 = arith.constant 0 : i32
    %c0_i32_1 = arith.constant 0 : i32
    return %c0_i32, %c0_i32_0 : i32, i32
  }
  func.func @transform_3(%arg0: i32, %arg1: i32) -> (i32, i32) {
    %c0_i32 = arith.constant 0 : i32
    %c0_i32_0 = arith.constant 0 : i32
    return %arg0, %c0_i32 : i32, i32
  }
}

</mosaic_0001>

<llo_original>
// kernel: tpu_custom_call.1
$region0: #{tpu_custom_call.1}
  #allocation0 [shape = 'u32[]', space=smem, size = 0x4, offset = 0x4, fixed_abs, tag = 'smem constant byte address 0x4 - core index']
  #allocation1 [shape = 'u32[144,128]{1,0:T(1,128)}', space=vmem, size = 0x12000, scoped, tag = 'internal scratch']
  #allocation2 [shape = 'f32[16,4]{1,0:T(8,128)}', space=vmem, size = 0x2000, scoped, tag = 'scratch operand']
  %s0 = inlined_call_operand.vmem [shape: f32[16,32], index: 0, kind: input, shape index: {}]
  %s1 = inlined_call_operand.vmem [shape: f32[32,4], index: 1, kind: input, shape index: {}]
  %s2 = inlined_call_operand.vmem [shape: f32[1,4], index: 2, kind: input, shape index: {}]
  %s3 = inlined_call_operand.vmem [shape: f32[16,4], index: 3, kind: output, shape index: {}]
  %s4 = sld [smem:[#allocation0]]
  $region30: #{tpu_custom_call.1} parent=0
    _
  %s6 = ssub.s32 1, %s4
  %s7 = scalar_select 0, %s6, %s4
  // Predicated region
  $region2: #{tpu_custom_call.1} parent=0 // pred_check
    _
  $region3: #{tpu_custom_call.1} parent=0 // pred_check_branch
    %9 = sbr.rel (0) target = $region5
  $region4: #{tpu_custom_call.1} parent=0 // pred_region
    _
  $region5: #{tpu_custom_call.1} parent=0 // pred_fallthru
    _
  // Predicated region
  $region6: #{tpu_custom_call.1} parent=0 // pred_check
    _
  $region7: #{tpu_custom_call.1} parent=0 // pred_check_branch
    %11 = sbr.rel (0) target = $region9
  $region8: #{tpu_custom_call.1} parent=0 // pred_region
    _
  $region9: #{tpu_custom_call.1} parent=0 // pred_fallthru
    _
  // Predicated region
  $region10: #{tpu_custom_call.1} parent=0 // pred_check
    _
  $region11: #{tpu_custom_call.1} parent=0 // pred_check_branch
    %13 = sbr.rel (0) target = $region13
  $region12: #{tpu_custom_call.1} parent=0 // pred_region
    _
  $region13: #{tpu_custom_call.1} parent=0 // pred_fallthru
    _
  %p14 = scmp.eq.s32.totalorder 0, 0
  // Predicated region
  $region14: #{tpu_custom_call.1} parent=0 // pred_check
    %p15 = pneg %p14
  $region15: #{tpu_custom_call.1} parent=0 // pred_check_branch
    %17 = sbr.rel (%p15) target = $region17
  $region16: #{tpu_custom_call.1} parent=0 // pred_region
    %vm18 = vcmask 31744
    %19 = vst.msk [vmem:[#allocation2] sm:$0xff] %vm18, 0.0
    %20 = vst.msk [vmem:[#allocation2 + $0x8] sm:$0xff] %vm18, 0.0
  $region17: #{tpu_custom_call.1} parent=0 // pred_fallthru
    _
  %v21 = vld [vmem:[#allocation2] sm:$0xff]
  %v22 = vld [vmem:[#allocation2 + $0x8] sm:$0xff]
  %v23 = vld [vmem:[%s0] sm:$0xff]
  %v24 = vld [vmem:[%s0 + $0x8] sm:$0xff]
  %v25 = vld [vmem:[%s1] sm:$0xff]
  %v26 = vld [vmem:[%s1 + $0x8] sm:$0xff]
  %v27 = vld [vmem:[%s1 + $0x10] sm:$0xff]
  %v28 = vld [vmem:[%s1 + $0x18] sm:$0xff]
  %vm29 = vcmask 261120
  %v31 = vsel %vm29, %v23, 0
  %v34 = vsel %vm29, %v24, 0
  %36 = vmatprep.subr.mxu0 0.0
  %37 = vmatpush1.msra.mxu0 0.0
  %38 = vmatprep.subr.mxu0 0.0
  %39 = vmatpush1.msra.mxu0 0.0
  %40 = vmatprep.subr.mxu0 0.0
  %41 = vmatpush1.msra.mxu0 0.0
  %42 = vmatprep.subr.mxu0 0.0
  %43 = vmatpush1.msra.mxu0 0.0
  %44 = vmatprep.subr.mxu0 0.0
  %45 = vmatpush1.msra.mxu0 0.0
  %46 = vmatprep.subr.mxu0 0.0
  %47 = vmatpush1.msra.mxu0 0.0
  %48 = vmatprep.subr.mxu0 0.0
  %49 = vmatpush1.msra.mxu0 0.0
  %50 = vmatprep.subr.mxu0 0.0
  %51 = vmatpush1.msra.mxu0 0.0
  %52 = vmatprep.subr.mxu0 0.0
  %53 = vmatpush1.msra.mxu0 0.0
  %54 = vmatprep.subr.mxu0 0.0
  %55 = vmatpush1.msra.mxu0 0.0
  %56 = vmatprep.subr.mxu0 0.0
  %57 = vmatpush1.msra.mxu0 0.0
  %58 = vmatprep.subr.mxu0 0.0
  %59 = vmatpush1.msra.mxu0 0.0
  %60 = vmatprep.subr.mxu0 0.0
  %61 = vmatpush1.msra.mxu0 %v28
  %62 = vmatprep.subr.mxu0 0.0
  %63 = vmatpush1.msra.mxu0 %v27
  %64 = vmatprep.subr.mxu0 0.0
  %65 = vmatpush1.msra.mxu0 %v26
  %66 = vmatprep.subr.mxu0 0.0
  %67 = vmatpush1.msra.mxu0 %v25
  %68 = vmatprep.subr.mxu0 0.0
  %69 = vmatpush2.msra.mxu0 0.0
  %70 = vmatprep.subr.mxu0 0.0
  %71 = vmatpush2.msra.mxu0 0.0
  %72 = vmatprep.subr.mxu0 0.0
  %73 = vmatpush2.msra.mxu0 0.0
  %74 = vmatprep.subr.mxu0 0.0
  %75 = vmatpush2.msra.mxu0 0.0
  %76 = vmatprep.subr.mxu0 0.0
  %77 = vmatpush2.msra.mxu0 0.0
  %78 = vmatprep.subr.mxu0 0.0
  %79 = vmatpush2.msra.mxu0 0.0
  %80 = vmatprep.subr.mxu0 0.0
  %81 = vmatpush2.msra.mxu0 0.0
  %82 = vmatprep.subr.mxu0 0.0
  %83 = vmatpush2.msra.mxu0 0.0
  %84 = vmatprep.subr.mxu0 0.0
  %85 = vmatpush2.msra.mxu0 0.0
  %86 = vmatprep.subr.mxu0 0.0
  %87 = vmatpush2.msra.mxu0 0.0
  %88 = vmatprep.subr.mxu0 0.0
  %89 = vmatpush2.msra.mxu0 0.0
  %90 = vmatprep.subr.mxu0 0.0
  %91 = vmatpush2.msra.mxu0 0.0
  %92 = vmatprep.subr.mxu0 0.0
  %93 = vmatpush2.msra.mxu0 0.0
  %94 = vmatprep.subr.mxu0 0.0
  %95 = vmatpush2.msra.mxu0 0.0
  %96 = vmatprep.subr.mxu0 0.0
  %97 = vmatpush2.msra.mxu0 0.0
  %98 = vmatprep.subr.mxu0 0.0
  %99 = vmatpush2.msra.mxu0 0.0
  %100 = vmatprep.mubr.f32.mxu0 0.0
  %101 = vmatmul.mubr.f32.gmra.mxu0 %v31
  %v102 = vpop.f32.mrf.mxu0
  %v103 = vadd.f32 0.0, %v102
  %v104 = vpop.f32.mrf.mxu0
  %105 = vmatprep.mubr.f32.mxu0 0.0
  %106 = vmatmul.mubr.f32.gmra.mxu0 %v34
  %v107 = vpop.f32.mrf.mxu0
  %v108 = vadd.f32 0.0, %v107
  %v109 = vpop.f32.mrf.mxu0
  %110 = vdwg.mxu0
  %v111 = vadd.f32 %v21, %v103
  %v112 = vadd.f32 %v22, %v108
  %vm113 = vcmask 31744
  %114 = vst.msk [vmem:[#allocation2] sm:$0xff] %vm113, %v111
  %115 = vst.msk [vmem:[#allocation2 + $0x8] sm:$0xff] %vm113, %v112
  // Predicated region
  $region18: #{tpu_custom_call.1} parent=0 // pred_check
    %p116 = pneg %p14
  $region19: #{tpu_custom_call.1} parent=0 // pred_check_branch
    %118 = sbr.rel (%p116) target = $region21
  $region20: #{tpu_custom_call.1} parent=0 // pred_region
    %v119 = vld [vmem:[#allocation2] sm:$0xff]
    %v120 = vld [vmem:[#allocation2 + $0x8] sm:$0xff]
    %v121 = vld [vmem:[%s2] sm:$0x1]
    %v123 = vlaneseq
    %v124 = vshrl.u32 %v123, 7
    %v125 = vsub.s32 0, %v124
    %v126 = vrot.slane %v121, %v125
    %v128 = vadd.f32 %v119, %v126
    %v129 = vadd.f32 %v120, %v126
    %130 = vst.msk [vmem:[%s3] sm:$0xff] %vm113, %v128
    %131 = vst.msk [vmem:[%s3 + $0x8] sm:$0xff] %vm113, %v129
  $region21: #{tpu_custom_call.1} parent=0 // pred_fallthru
    _
  // Predicated region
  $region22: #{tpu_custom_call.1} parent=0 // pred_check
    _
  $region23: #{tpu_custom_call.1} parent=0 // pred_check_branch
    %133 = sbr.rel (0) target = $region25
  $region24: #{tpu_custom_call.1} parent=0 // pred_region
    _
  $region25: #{tpu_custom_call.1} parent=0 // pred_fallthru
    _
  // Predicated region
  $region26: #{tpu_custom_call.1} parent=0 // pred_check
    _
  $region27: #{tpu_custom_call.1} parent=0 // pred_check_branch
    %135 = sbr.rel (0) target = $region29
  $region28: #{tpu_custom_call.1} parent=0 // pred_region
    _
  $region29: #{tpu_custom_call.1} parent=0 // pred_fallthru
    _

</llo_original>
